<compile_context>
chip_gen: v7x
topology: tpu7x:2x2x1
jax: 0.10.0
libtpu: 0.0.40
codegen_flags: <defaults>
</compile_context>

<pallas_src>
import functools

import jax
import jax.numpy as jnp
from jax import lax
from jax.experimental import pallas as pl
from jax.experimental.pallas import tpu as pltpu

_LANE = 128
_NSPLIT = 2          # leading "parallel" axis of pass 1 (uses v7x's 2nd core)


def _round_up(x, m):
    return (x + m - 1) // m * m


def _cdiv(a, b):
    return -(-a // b)


def _vmem_capacity_bytes():
    """Physical per-core VMEM; conservative (v7x-sized) fallback."""
    try:
        return int(pltpu.get_tpu_info().vmem_capacity_bytes)
    except Exception:
        return 64 << 20


def _vmem_request(est_bytes, cap_bytes):
    """Scoped-VMEM request derived from block sizes, capped per-generation."""
    return int(min(max(est_bytes + (8 << 20), 32 << 20), cap_bytes))


# -----------------------------------------------------------------------------
# Kernels
# -----------------------------------------------------------------------------
def _cab_fused_kernel(x_ref, o_ref, *, add_residual):
    """softmax(X @ X^T, axis=-1) @ X (+ X), fully VMEM-resident."""
    x = x_ref[...]                                                  # (C, N)
    s = lax.dot_general(x, x, (((1,), (1,)), ((), ())),
                        preferred_element_type=jnp.float32)         # (C, C)
    s = s - jnp.max(s, axis=-1, keepdims=True)
    e = jnp.exp(s)
    p = e / jnp.sum(e, axis=-1, keepdims=True)
    if x.dtype != jnp.float32:
        p = p.astype(x.dtype)          # native (e.g. bf16) MXU path
    y = jnp.dot(p, x, preferred_element_type=jnp.float32)
    if add_residual:
        y = y + x.astype(jnp.float32)
    o_ref[...] = y.astype(o_ref.dtype)


def _energy_partial_kernel(x_ref, part_ref, *, n_cols, tile_n):
    """Pass 1: per core-slot partial S += X_tile @ X_tile^T (masked ragged)."""
    c = pl.program_id(0)                  # core-slot ("parallel")
    t = pl.program_id(1)                  # lane-tile within slot ("arbitrary")
    tile = c * pl.num_programs(1) + t     # global lane-tile index

    @pl.when(t == 0)
    def _init():
        part_ref[...] = jnp.zeros_like(part_ref)

    x = x_ref[...]                                                  # (C, TN)
    # Mask columns >= N: covers both the ragged last tile and the clamped
    # phantom tiles of the 2-way split (tile * TN >= N there).
    col = tile * tile_n + lax.broadcasted_iota(jnp.int32, (1, tile_n), 1)
    xm = jnp.where(col < n_cols, x, jnp.zeros_like(x))
    part_ref[...] += lax.dot_general(
        xm, xm, (((1,), (1,)), ((), ())),
        preferred_element_type=jnp.float32)[None]


def _apply_kernel(p_ref, x_ref, o_ref, *, add_residual):
    """Pass 2 (parallel lane tiles): Y_tile = P @ X_tile (+ X_tile)."""
    x = x_ref[...]                                                  # (C, TN)
    p = p_ref[...]                                                  # (C, C)
    if x.dtype != jnp.float32:
        p = p.astype(x.dtype)
    y = jnp.dot(p, x, preferred_element_type=jnp.float32)
    if add_residual:
        y = y + x.astype(jnp.float32)
    o_ref[...] = y.astype(o_ref.dtype)   # partial last block masked on store


# -----------------------------------------------------------------------------
# Wrapper
# -----------------------------------------------------------------------------
def cab_forward(x, C, H, W, *, max_tile_bytes=None, max_fused_bytes=None):
    """Pallas TPU implementation of CAB.forward(x, C, H, W)."""
    N = H * W
    assert x.size == C * N, "x must be reshapeable to (C, H*W)"

    x_flat = x.reshape(C, N)                       # native dtype, no host cast
    dtype = x_flat.dtype
    itemsize = jnp.dtype(dtype).itemsize

    # The module's `x5.reshape(C, W, H) + x` is an exact flat add whenever the
    # residual already has shape (C, W, H) (the usual H == W CHW case); then we
    # fuse it into the kernel epilogue, otherwise add afterwards.
    fuse_residual = (tuple(x.shape) == (C, W, H))

    vmem_cap = _vmem_capacity_bytes()
    cap_request = max(vmem_cap - (16 << 20), 32 << 20)   # 48 MiB v7x, 112 MiB v6e

    # Estimated VMEM footprint of the fused single-kernel path
    # (X in + Y out + f32 matmul result + small C x C temps).
    fused_est = 2 * C * N * itemsize + C * N * 4 + 6 * C * C * 4
    if max_fused_bytes is None:
        max_fused_bytes = cap_request - (8 << 20)
    use_fused = fused_est <= max_fused_bytes

    if use_fused:
        # ---- single fused kernel: one HBM round trip for the activation ----
        y = pl.pallas_call(
            functools.partial(_cab_fused_kernel, add_residual=fuse_residual),
            out_shape=jax.ShapeDtypeStruct((C, N), dtype),
            compiler_params=pltpu.CompilerParams(
                vmem_limit_bytes=_vmem_request(fused_est, cap_request)),
        )(x_flat)
    else:
        # Lane tiling of the spatial axis.
        if max_tile_bytes is None:
            max_tile_bytes = max(vmem_cap // 16, 1 << 20)   # ~4 MiB v7x / 8 MiB v6e
        tn = max(_LANE, (max_tile_bytes // (C * itemsize)) // _LANE * _LANE)
        tn = min(tn, _round_up(N, _LANE))
        n_blocks = _cdiv(N, tn)
        tiles_per_slot = _cdiv(n_blocks, _NSPLIT)

        # ---- pass 1: partial energies, one (C, C) slot per core ----
        vmem1 = _vmem_request(2 * C * tn * itemsize + 2 * C * C * 4, cap_request)
        partials = pl.pallas_call(
            functools.partial(_energy_partial_kernel, n_cols=N, tile_n=tn),
            out_shape=jax.ShapeDtypeStruct((_NSPLIT, C, C), jnp.float32),
            grid_spec=pltpu.PrefetchScalarGridSpec(
                num_scalar_prefetch=0,
                grid=(_NSPLIT, tiles_per_slot),
                in_specs=[pl.BlockSpec(
                    (C, tn),
                    # Clamp phantom tiles of the split to a valid block; the
                    # kernel masks their contribution to exactly zero.
                    lambda c, t: (0, jnp.minimum(c * tiles_per_slot + t,
                                                 n_blocks - 1)))],
                out_specs=pl.BlockSpec((1, C, C), lambda c, t: (c, 0, 0)),
            ),
            compiler_params=pltpu.CompilerParams(
                dimension_semantics=("parallel", "arbitrary"),
                vmem_limit_bytes=vmem1),
        )(x_flat)

        # Tiny XLA epilogue: sum per-core partials, softmax in f32.
        s = partials.sum(axis=0)
        p = jax.nn.softmax(s, axis=-1)

        # ---- pass 2: Y = P @ X (+ X), lane-dense blocks, parallel grid ----
        vmem2 = _vmem_request(
            2 * C * C * 4 + 2 * C * tn * itemsize + 2 * C * tn * max(4, itemsize),
            cap_request)
        y = pl.pallas_call(
            functools.partial(_apply_kernel, add_residual=fuse_residual),
            out_shape=jax.ShapeDtypeStruct((C, N), dtype),
            grid_spec=pltpu.PrefetchScalarGridSpec(
                num_scalar_prefetch=0,
                grid=(n_blocks,),
                in_specs=[
                    pl.BlockSpec((C, C), lambda j: (0, 0)),   # P stays resident
                    pl.BlockSpec((C, tn), lambda j: (0, j)),
                ],
                out_specs=pl.BlockSpec((C, tn), lambda j: (0, j)),
            ),
            compiler_params=pltpu.CompilerParams(
                dimension_semantics=("parallel",),
                vmem_limit_bytes=vmem2),
        )(p, x_flat)

    out = y.reshape(C, W, H)
    if not fuse_residual:
        out = out + x        # PyTorch broadcasting semantics for the residual
    return out


# -----------------------------------------------------------------------------
# Plain-JAX reference of the PyTorch forward (numerical sanity check)
# -----------------------------------------------------------------------------
def _cab_reference(x, C, H, W):
    x1 = x.reshape(C, H * W).astype(jnp.float32)
    s = jnp.matmul(x1, x1.T, precision=lax.Precision.HIGHEST)
    p = jax.nn.softmax(s, axis=-1)
    y = jnp.matmul(p, x1, precision=lax.Precision.HIGHEST)
    return (y.reshape(C, W, H) + x).astype(x.dtype)


if __name__ == "__main__":
    # Default CAB config: nc=4 channels, small square spatial map (fused path).
    C, H, W = 4, 16, 16
    x = jax.random.normal(jax.random.PRNGKey(0), (C, H, W), dtype=jnp.float32)
    out = jax.block_until_ready(cab_forward(x, C, H, W))
    assert out.shape == (C, W, H), out.shape
    assert bool(jnp.all(jnp.isfinite(out)))
    ref = _cab_reference(x, C, H, W)
    assert bool(jnp.allclose(out, ref, rtol=5e-2, atol=5e-2))

    # Ragged spatial size (N = 900, not a multiple of 128), forced through the
    # tiled path with an ODD number of lane tiles -> exercises ragged masking
    # and the clamped phantom tile of the 2-way core split.
    C2, H2, W2 = 8, 30, 30
    x2 = jax.random.normal(jax.random.PRNGKey(1), (C2, H2, W2), jnp.float32)
    out2 = jax.block_until_ready(
        cab_forward(x2, C2, H2, W2, max_fused_bytes=0, max_tile_bytes=12 * 1024))
    assert out2.shape == (C2, W2, H2)
    assert bool(jnp.all(jnp.isfinite(out2)))
    ref2 = _cab_reference(x2, C2, H2, W2)
    assert bool(jnp.allclose(out2, ref2, rtol=5e-2, atol=5e-2))

    # Larger map: fused and tiled paths must agree.
    C3, H3, W3 = 64, 64, 64
    x3 = jax.random.normal(jax.random.PRNGKey(2), (C3, H3, W3), jnp.float32)
    out_fused = jax.block_until_ready(cab_forward(x3, C3, H3, W3))
    out_tiled = jax.block_until_ready(
        cab_forward(x3, C3, H3, W3, max_fused_bytes=0,
                    max_tile_bytes=256 * 1024))
    assert bool(jnp.all(jnp.isfinite(out_tiled)))
    assert bool(jnp.allclose(out_fused, out_tiled, rtol=5e-2, atol=5e-2))

    print("KERNEL_OK")
</pallas_src>

<mosaic_0001>
module attributes {stable_mosaic.version = 11 : i64} {
  func.func @_cab_fused_kernel(%arg0: memref<4x256xf32, #tpu.memory_space<vmem>>, %arg1: memref<4x256xf32, #tpu.memory_space<vmem>>) attributes {dimension_semantics = [], scalar_prefetch = 0 : i64, scratch_operands = 0 : i64, tpu.core_type = #tpu.core_type<tc>} {
    %c0 = arith.constant 0 : index
    %c0_0 = arith.constant 0 : index
    %0 = vector.load %arg0[%c0, %c0_0] : memref<4x256xf32, #tpu.memory_space<vmem>>, vector<4x256xf32>
    %cst = arith.constant dense<0.000000e+00> : vector<4x4xf32>
    %1 = tpu.matmul %0, %0, %cst {dimension_numbers = #tpu.dot_dimension_numbers<[1], [1], [0], [0], [0, 0, 1, 0], [], []>} : vector<4x256xf32>, vector<4x256xf32>, vector<4x4xf32> -> vector<4x4xf32>
    %cst_1 = arith.constant dense<0xFF800000> : vector<4xf32>
    %2 = vector.multi_reduction <maximumf>, %1, %cst_1 [1] : vector<4x4xf32> to vector<4xf32>
    %3 = vector.shape_cast %2 : vector<4xf32> to vector<4x1xf32>
    %4 = vector.broadcast %3 : vector<4x1xf32> to vector<4x4xf32>
    %5 = arith.subf %1, %4 : vector<4x4xf32>
    %6 = math.exp %5 : vector<4x4xf32>
    %cst_2 = arith.constant dense<0.000000e+00> : vector<4xf32>
    %7 = vector.multi_reduction <add>, %6, %cst_2 [1] : vector<4x4xf32> to vector<4xf32>
    %8 = vector.shape_cast %7 : vector<4xf32> to vector<4x1xf32>
    %9 = vector.broadcast %8 : vector<4x1xf32> to vector<4x4xf32>
    %10 = arith.divf %6, %9 : vector<4x4xf32>
    %cst_3 = arith.constant dense<0.000000e+00> : vector<4x256xf32>
    %11 = tpu.matmul %10, %0, %cst_3 {dimension_numbers = #tpu.dot_dimension_numbers<[1], [0], [0], [1], [0, 0, 1, 1], [], []>} : vector<4x4xf32>, vector<4x256xf32>, vector<4x256xf32> -> vector<4x256xf32>
    %12 = arith.addf %11, %0 : vector<4x256xf32>
    %c0_4 = arith.constant 0 : index
    %c0_5 = arith.constant 0 : index
    %13 = vector.load %arg1[%c0_4, %c0_5] : memref<4x256xf32, #tpu.memory_space<vmem>>, vector<4x256xf32>
    tpu.vector_store %arg1[%c0_4, %c0_5], %12 {strides = array<i32>} : memref<4x256xf32, #tpu.memory_space<vmem>>, vector<4x256xf32>,
    return
  }
}

</mosaic_0001>

<llo_original>
// kernel: tpu_custom_call.1
$region0: #{tpu_custom_call.1}
  #allocation0 [shape = 'u32[]', space=smem, size = 0x4, offset = 0x4, fixed_abs, tag = 'smem constant byte address 0x4 - core index']
  #allocation1 [shape = 'u32[144,128]{1,0:T(1,128)}', space=vmem, size = 0x12000, scoped, tag = 'internal scratch']
  %s0 = inlined_call_operand.hbm [shape: f32[4,256], index: 0, kind: input, shape index: {}]
  %s1 = inlined_call_operand.hbm [shape: f32[4,256], index: 1, kind: output, shape index: {}]
  %s2 = sld [smem:[#allocation0]]
  $region18: #{tpu_custom_call.1} parent=0
    _
  %s4 = ssub.s32 1, %s2
  %s5 = scalar_select 0, %s4, %s2
  $region1: #{tpu_custom_call.1} parent=0
    #allocation2 [shape = 'u8[4096]{0}', space=vmem, size = 0x1000, scoped, tag = 'input window, operand 0, single buffered']
    #allocation3 [shape = 's32[1]{0}', space=sflag, size = 0x4, scoped, tag = 'scoped memory for tpu_custom_call.1']
    #allocation4 [shape = 's32[1]{0}', space=sflag, size = 0x4, scoped, tag = 'scoped memory for tpu_custom_call.1']
    #allocation5 [shape = 'u8[4096]{0}', space=vmem, size = 0x1000, scoped, tag = 'output window, operand 0, single buffered']
    %6 = vsyncpa [#allocation3], 0
    %7 = vsyncpa [#allocation4], 0
    // Predicated region
    $region2: #{tpu_custom_call.1} parent=1 // pred_check
      _
    $region3: #{tpu_custom_call.1} parent=1 // pred_check_branch
      %9 = sbr.rel (0) target = $region5
    $region4: #{tpu_custom_call.1} parent=1 // pred_region
      %s11 = ssub.s32 128, 128
      %12 = vsyncadd [#allocation3], %s11
      %s14 = sshll.u32 [#allocation2], 4
      %s15 = int_to_ptr.vmem [resolvable:$true] %s14
      %17 = dma.hbm_to_vmem [thread:$0]  %s0, 128, %s15, [#allocation3]
    $region5: #{tpu_custom_call.1} parent=1 // pred_fallthru
      _
    // Predicated region
    $region6: #{tpu_custom_call.1} parent=1 // pred_check
      _
    $region7: #{tpu_custom_call.1} parent=1 // pred_check_branch
      %19 = sbr.rel (0) target = $region9
    $region8: #{tpu_custom_call.1} parent=1 // pred_region
      %20 = dma.done [#allocation3], 128
    $region9: #{tpu_custom_call.1} parent=1 // pred_fallthru
      _
    %v21 = vld [vmem:[#allocation2] sm:$0xff]
    %v23 = vcombine.high %v21, %v21
    %25 = vmatprep.subr.mxu0 %v23
    %26 = vmatpush1.xpose.msra.mxu0 %v21
    %27 = vmatprep.subr.mxu0 0.0
    %28 = vmatpush1.xpose.msra.mxu0 0.0
    %29 = vmatprep.subr.mxu0 0.0
    %30 = vmatpush1.xpose.msra.mxu0 0.0
    %31 = vmatprep.subr.mxu0 0.0
    %32 = vmatpush1.xpose.msra.mxu0 0.0
    %33 = vmatprep.subr.mxu0 0.0
    %34 = vmatpush1.xpose.msra.mxu0 0.0
    %35 = vmatprep.subr.mxu0 0.0
    %36 = vmatpush1.xpose.msra.mxu0 0.0
    %37 = vmatprep.subr.mxu0 0.0
    %38 = vmatpush1.xpose.msra.mxu0 0.0
    %39 = vmatprep.subr.mxu0 0.0
    %40 = vmatpush1.xpose.msra.mxu0 0.0
    %41 = vmatprep.subr.mxu0 0.0
    %42 = vmatpush1.xpose.msra.mxu0 0.0
    %43 = vmatprep.subr.mxu0 0.0
    %44 = vmatpush1.xpose.msra.mxu0 0.0
    %45 = vmatprep.subr.mxu0 0.0
    %46 = vmatpush1.xpose.msra.mxu0 0.0
    %47 = vmatprep.subr.mxu0 0.0
    %48 = vmatpush1.xpose.msra.mxu0 0.0
    %49 = vmatprep.subr.mxu0 0.0
    %50 = vmatpush1.xpose.msra.mxu0 0.0
    %51 = vmatprep.subr.mxu0 0.0
    %52 = vmatpush1.xpose.msra.mxu0 0.0
    %53 = vmatprep.subr.mxu0 0.0
    %54 = vmatpush1.xpose.msra.mxu0 0.0
    %55 = vmatprep.subr.mxu0 0.0
    %56 = vmatpush1.xpose.msra.mxu0 0.0
    %57 = vmatprep.subr.mxu0 0.0
    %58 = vmatpush1.xpose.msra.mxu0 0.0
    %59 = vmatprep.subr.mxu0 0.0
    %60 = vmatpush1.xpose.msra.mxu0 0.0
    %61 = vmatprep.subr.mxu0 0.0
    %62 = vmatpush1.xpose.msra.mxu0 0.0
    %63 = vmatprep.subr.mxu0 0.0
    %64 = vmatpush1.xpose.msra.mxu0 0.0
    %65 = vmatprep.subr.mxu0 0.0
    %66 = vmatpush1.xpose.msra.mxu0 0.0
    %67 = vmatprep.subr.mxu0 0.0
    %68 = vmatpush1.xpose.msra.mxu0 0.0
    %69 = vmatprep.subr.mxu0 0.0
    %70 = vmatpush1.xpose.msra.mxu0 0.0
    %71 = vmatprep.subr.mxu0 0.0
    %72 = vmatpush1.xpose.msra.mxu0 0.0
    %73 = vmatprep.subr.mxu0 0.0
    %74 = vmatpush1.xpose.msra.mxu0 0.0
    %75 = vmatprep.subr.mxu0 0.0
    %76 = vmatpush1.xpose.msra.mxu0 0.0
    %77 = vmatprep.subr.mxu0 0.0
    %78 = vmatpush1.xpose.msra.mxu0 0.0
    %79 = vmatprep.subr.mxu0 0.0
    %80 = vmatpush1.xpose.msra.mxu0 0.0
    %81 = vmatprep.subr.mxu0 0.0
    %82 = vmatpush1.xpose.msra.mxu0 0.0
    %83 = vmatprep.subr.mxu0 0.0
    %84 = vmatpush1.xpose.msra.mxu0 0.0
    %85 = vmatprep.subr.mxu0 0.0
    %86 = vmatpush1.xpose.msra.mxu0 0.0
    %87 = vmatprep.subr.mxu0 0.0
    %88 = vmatpush1.xpose.msra.mxu0 0.0
    %89 = vmatprep.mubr.f32.mxu0 %v23
    %90 = vmatmul.mubr.f32.gmra.mrb[0].mxu0 %v21
    %v91 = vpop.f32.mrb[0].mxu0
    %v92 = vadd.f32 0.0, %v91
    %v93 = vpop.f32.mrb[0].mxu0
    %94 = vdwg.mxu0
    %vm95 = vcmask 27648
    %v96 = vsel %vm95, %v92, -inf
    %97 = vmax.xlane.f32.xlu0 %v96
    %v98 = vpop.xlane.xlu0 %97
    %v99 = vsub.f32 %v92, %v98
    %v100 = vmul.f32 %v99, 1.442695
    %v101 = vpow.pop %v100
    %v102 = vsel %vm95, %v101, 0.0
    %103 = vadd.xlane.f32.xlu0 %v102
    %v104 = vpop.xlane.xlu0 %103
    %v105 = vrcp.pop %v104
    %v106 = vmul.f32 %v101, %v105
    %vm107 = vcmask 31744
    %v109 = vsel %vm107, %v106, 0
    %vm111 = vcmask 1043456
    %v112 = vsel %vm111, %v21, 0
    %v114 = vsel %vm111, %v23, 0
    %116 = vmatprep.subr.mxu0 %v114
    %117 = vmatpush1.msra.mxu0 %v112
    %118 = vmatprep.subr.mxu0 0.0
    %119 = vmatpush1.msra.mxu0 0.0
    %120 = vmatprep.subr.mxu0 0.0
    %121 = vmatpush1.msra.mxu0 0.0
    %122 = vmatprep.subr.mxu0 0.0
    %123 = vmatpush1.msra.mxu0 0.0
    %124 = vmatprep.subr.mxu0 0.0
    %125 = vmatpush1.msra.mxu0 0.0
    %126 = vmatprep.subr.mxu0 0.0
    %127 = vmatpush1.msra.mxu0 0.0
    %128 = vmatprep.subr.mxu0 0.0
    %129 = vmatpush1.msra.mxu0 0.0
    %130 = vmatprep.subr.mxu0 0.0
    %131 = vmatpush1.msra.mxu0 0.0
    %132 = vmatprep.subr.mxu0 0.0
    %133 = vmatpush1.msra.mxu0 0.0
    %134 = vmatprep.subr.mxu0 0.0
    %135 = vmatpush1.msra.mxu0 0.0
    %136 = vmatprep.subr.mxu0 0.0
    %137 = vmatpush1.msra.mxu0 0.0
    %138 = vmatprep.subr.mxu0 0.0
    %139 = vmatpush1.msra.mxu0 0.0
    %140 = vmatprep.subr.mxu0 0.0
    %141 = vmatpush1.msra.mxu0 0.0
    %142 = vmatprep.subr.mxu0 0.0
    %143 = vmatpush1.msra.mxu0 0.0
    %144 = vmatprep.subr.mxu0 0.0
    %145 = vmatpush1.msra.mxu0 0.0
    %146 = vmatprep.subr.mxu0 0.0
    %147 = vmatpush1.msra.mxu0 0.0
    %148 = vmatprep.subr.mxu0 0.0
    %149 = vmatpush1.msra.mxu0 0.0
    %150 = vmatprep.subr.mxu0 0.0
    %151 = vmatpush1.msra.mxu0 0.0
    %152 = vmatprep.subr.mxu0 0.0
    %153 = vmatpush1.msra.mxu0 0.0
    %154 = vmatprep.subr.mxu0 0.0
    %155 = vmatpush1.msra.mxu0 0.0
    %156 = vmatprep.subr.mxu0 0.0
    %157 = vmatpush1.msra.mxu0 0.0
    %158 = vmatprep.subr.mxu0 0.0
    %159 = vmatpush1.msra.mxu0 0.0
    %160 = vmatprep.subr.mxu0 0.0
    %161 = vmatpush1.msra.mxu0 0.0
    %162 = vmatprep.subr.mxu0 0.0
    %163 = vmatpush1.msra.mxu0 0.0
    %164 = vmatprep.subr.mxu0 0.0
    %165 = vmatpush1.msra.mxu0 0.0
    %166 = vmatprep.subr.mxu0 0.0
    %167 = vmatpush1.msra.mxu0 0.0
    %168 = vmatprep.subr.mxu0 0.0
    %169 = vmatpush1.msra.mxu0 0.0
    %170 = vmatprep.subr.mxu0 0.0
    %171 = vmatpush1.msra.mxu0 0.0
    %172 = vmatprep.subr.mxu0 0.0
    %173 = vmatpush1.msra.mxu0 0.0
    %174 = vmatprep.subr.mxu0 0.0
    %175 = vmatpush1.msra.mxu0 0.0
    %176 = vmatprep.subr.mxu0 0.0
    %177 = vmatpush1.msra.mxu0 0.0
    %178 = vmatprep.subr.mxu0 0.0
    %179 = vmatpush1.msra.mxu0 0.0
    %180 = vmatprep.mubr.f32.mxu0 0.0
    %181 = vmatmul.mubr.f32.gmra.mrb[0].mxu0 %v109
    %v182 = vpop.f32.mrb[0].mxu0
    %v183 = vadd.f32 %v21, %v182
    %v184 = vpop.f32.mrb[0].mxu0
    %v185 = vadd.f32 %v23, %v184
    %186 = vdwg.mxu0
    %v189 = vcombine.low %v183, %v185
    %191 = vst [vmem:[#allocation5] sm:$0xff] %v189
    // Predicated region
    $region10: #{tpu_custom_call.1} parent=1 // pred_check
      _
    $region11: #{tpu_custom_call.1} parent=1 // pred_check_branch
      %193 = sbr.rel (0) target = $region13
    $region12: #{tpu_custom_call.1} parent=1 // pred_region
      %s195 = ssub.s32 128, 128
      %196 = vsyncadd [#allocation4], %s195
      %s198 = sshll.u32 [#allocation5], 4
      %s199 = int_to_ptr.vmem [resolvable:$true] %s198
      %201 = dma.vmem_to_hbm [thread:$0]  %s199, 128, %s1, [#allocation4]
    $region13: #{tpu_custom_call.1} parent=1 // pred_fallthru
      _
    // Predicated region
    $region14: #{tpu_custom_call.1} parent=1 // pred_check
      _
    $region15: #{tpu_custom_call.1} parent=1 // pred_check_branch
      %203 = sbr.rel (0) target = $region17
    $region16: #{tpu_custom_call.1} parent=1 // pred_region
      %204 = dma.done [#allocation4], 128
    $region17: #{tpu_custom_call.1} parent=1 // pred_fallthru
      _
    %205 = vsyncpa [#allocation3], 1
    %206 = vsyncpa [#allocation4], 1

</llo_original>
